<compile_context>
chip_gen: v7x
topology: tpu7x:2x2x1
jax: 0.10.0
libtpu: 0.0.40
codegen_flags: <defaults>
</compile_context>

<pallas_src>
import functools

import jax
import jax.numpy as jnp
import numpy as np
from jax.experimental import pallas as pl
from jax.experimental.pallas import tpu as pltpu


# ----------------------------------------------------------------------------
# Helpers.
# ----------------------------------------------------------------------------
def _round_up(v, m):
    return -(-v // m) * m


def _vmem_limit_bytes(working_set_bytes):
    """Scoped-VMEM limit: actual working set + 25% + 2 MiB compiler headroom,
    floored at 16 MiB and capped safely below v7x's 64 MiB per-core VMEM."""
    limit = working_set_bytes + working_set_bytes // 4 + (2 << 20)
    return int(min(max(limit, 16 << 20), 48 << 20))


# ----------------------------------------------------------------------------
# Pallas kernels.
# ----------------------------------------------------------------------------
def _split_copy_kernel(x_ref, asv_ref, cm_ref, *, asv_dim, cm_dim):
    # Ref-sliced loads feeding full-tile lane-dense stores: no whole-tile
    # materialization, minimal vreg live range.  asv_dim/cm_dim are static;
    # when they are multiples of 128 the slices fall on vreg boundaries
    # (pure vld/vst, no XLU, no masked stores).
    asv_ref[...] = x_ref[:, pl.ds(0, asv_dim)].astype(asv_ref.dtype)
    cm_ref[...] = x_ref[:, pl.ds(asv_dim, cm_dim)].astype(cm_ref.dtype)


def _fused_split_kernel(enro_ref, test_ref,
                        e_asv_ref, e_cm_ref, t_asv_ref, t_cm_ref,
                        *, asv_dim, cm_dim):
    # Both matrices split in ONE kernel launch (small-batch frontend regime).
    e_asv_ref[...] = enro_ref[:, pl.ds(0, asv_dim)].astype(e_asv_ref.dtype)
    e_cm_ref[...] = enro_ref[:, pl.ds(asv_dim, cm_dim)].astype(e_cm_ref.dtype)
    t_asv_ref[...] = test_ref[:, pl.ds(0, asv_dim)].astype(t_asv_ref.dtype)
    t_cm_ref[...] = test_ref[:, pl.ds(asv_dim, cm_dim)].astype(t_cm_ref.dtype)


# ----------------------------------------------------------------------------
# Wrappers.
# ----------------------------------------------------------------------------
def split_embedding(x, asv_dim, *, out_dtype=None,
                    vmem_budget_bytes=12 * 1024 * 1024):
    """Split x[N, D] into (x[:, :asv_dim], x[:, asv_dim:]) with a Pallas copy.

    vmem_budget_bytes bounds the double-buffered working set (v5e-safe
    default); the resulting limit is passed explicitly to the compiler.
    out_dtype: optional on-the-fly cast (e.g. bf16 to cut HBM write traffic);
    default keeps the input dtype (semantics-preserving).
    """
    N, D = x.shape
    if not 0 < asv_dim <= D:
        raise ValueError(f"asv_dim={asv_dim} must satisfy 0 < asv_dim <= D={D}")
    cm_dim = D - asv_dim
    odtype = jnp.dtype(out_dtype) if out_dtype is not None else x.dtype

    if cm_dim == 0:
        # Degenerate: no CM columns -- nothing to split.
        return x.astype(odtype), jnp.zeros((N, 0), odtype)

    in_item = int(np.dtype(x.dtype).itemsize)
    out_item = int(np.dtype(odtype).itemsize)
    # Sublane multiple for the row (second-to-last) block dim.
    sub = {4: 8, 2: 16, 1: 32}.get(in_item, 8)

    # Byte-based row-tile cap: double-buffered input tile + both output tiles.
    bytes_per_row = 2 * D * (in_item + out_item)
    tm_cap = max(sub, (vmem_budget_bytes // bytes_per_row) // sub * sub)

    if N > 2 * sub:
        # Guarantee >= 2 grid steps so dimension_semantics=("parallel",)
        # actually engages both v7x TensorCores (harmless on v5e/v6e).
        tm = min(tm_cap, _round_up(pl.cdiv(N, 2), sub))
    else:
        tm = N                       # full-extent row block is always legal

    grid = (pl.cdiv(N, tm),)
    working_set = 2 * tm * D * (in_item + out_item)

    kernel = functools.partial(_split_copy_kernel,
                               asv_dim=asv_dim, cm_dim=cm_dim)
    asv_out, cm_out = pl.pallas_call(
        kernel,
        out_shape=(
            jax.ShapeDtypeStruct((N, asv_dim), odtype),
            jax.ShapeDtypeStruct((N, cm_dim), odtype),
        ),
        grid=grid,
        in_specs=[pl.BlockSpec((tm, D), lambda i: (i, 0))],
        out_specs=(
            pl.BlockSpec((tm, asv_dim), lambda i: (i, 0)),
            pl.BlockSpec((tm, cm_dim), lambda i: (i, 0)),
        ),
        compiler_params=pltpu.CompilerParams(
            dimension_semantics=("parallel",),
            vmem_limit_bytes=_vmem_limit_bytes(working_set),
        ),
    )(x)
    return asv_out, cm_out


def split_embedding_pair(enro, test, asv_dim, *, out_dtype=None,
                         fused_budget_bytes=8 * 1024 * 1024):
    """Split both [N, D] matrices at column asv_dim.

    Uses ONE fused pallas_call when the combined working set is small (the
    realistic frontend regime), otherwise falls back to two tiled calls.
    Returns (enro_asv, test_asv, enro_cm, test_cm).
    """
    N_e, D_e = enro.shape
    N_t, D_t = test.shape
    if D_e != D_t:
        raise ValueError(f"enro/test feature dims differ: {D_e} vs {D_t}")
    D = D_e
    cm_dim = D - asv_dim
    e_odtype = jnp.dtype(out_dtype) if out_dtype is not None else enro.dtype
    t_odtype = jnp.dtype(out_dtype) if out_dtype is not None else test.dtype

    e_io = int(np.dtype(enro.dtype).itemsize) + int(np.dtype(e_odtype).itemsize)
    t_io = int(np.dtype(test.dtype).itemsize) + int(np.dtype(t_odtype).itemsize)
    working_set = 2 * (N_e * D * e_io + N_t * D * t_io)

    if cm_dim <= 0 or working_set > fused_budget_bytes:
        # Large matrices: two independently tiled (megacore-friendly) calls.
        e_asv, e_cm = split_embedding(enro, asv_dim, out_dtype=out_dtype)
        t_asv, t_cm = split_embedding(test, asv_dim, out_dtype=out_dtype)
        return e_asv, t_asv, e_cm, t_cm

    kernel = functools.partial(_fused_split_kernel,
                               asv_dim=asv_dim, cm_dim=cm_dim)
    e_asv, e_cm, t_asv, t_cm = pl.pallas_call(
        kernel,
        out_shape=(
            jax.ShapeDtypeStruct((N_e, asv_dim), e_odtype),
            jax.ShapeDtypeStruct((N_e, cm_dim), e_odtype),
            jax.ShapeDtypeStruct((N_t, asv_dim), t_odtype),
            jax.ShapeDtypeStruct((N_t, cm_dim), t_odtype),
        ),
        grid=(1,),
        in_specs=[
            pl.BlockSpec((N_e, D), lambda i: (0, 0)),
            pl.BlockSpec((N_t, D), lambda i: (0, 0)),
        ],
        out_specs=(
            pl.BlockSpec((N_e, asv_dim), lambda i: (0, 0)),
            pl.BlockSpec((N_e, cm_dim), lambda i: (0, 0)),
            pl.BlockSpec((N_t, asv_dim), lambda i: (0, 0)),
            pl.BlockSpec((N_t, cm_dim), lambda i: (0, 0)),
        ),
        compiler_params=pltpu.CompilerParams(
            dimension_semantics=("arbitrary",),
            vmem_limit_bytes=_vmem_limit_bytes(working_set),
        ),
    )(enro, test)
    return e_asv, t_asv, e_cm, t_cm


# ----------------------------------------------------------------------------
# FrontEnd wrapper (embedding-input path only).
# ----------------------------------------------------------------------------
class FrontEnd:
    """JAX port of FrontEnd with frontend_use_embedding_input=True."""

    def __init__(self, config):
        self.asv_emb_dim = config['asv_config']['emb_dim']
        self.cm_emb_dim = config['cm_config']['emb_dim']
        self.flag_update = config['update']
        self.flag_use_embedding_input = config['frontend_use_embedding_input']
        # Optional bf16 output cast (HBM-BW win) if downstream tolerates it;
        # default None keeps exact reference semantics.
        self.out_dtype = config.get('frontend_out_dtype', None)
        if not self.flag_use_embedding_input:
            # TODO(synk): audio path needs external ECAPA-TDNN / CM models.
            raise NotImplementedError(
                "Only the embedding-input path is implemented in Pallas.")

    def _forward_emb(self, enro_data, test_data):
        asv_dim = self.asv_emb_dim
        if enro_data.shape[-1] == asv_dim:
            # enro has only ASV columns: split just the test matrix; zeros for
            # enro_cm are shaped like the TEST cm embedding (matches
            # torch.zeros_like(cm_emb) in the reference -- intentional).
            asv_emb, cm_emb = split_embedding(test_data, asv_dim,
                                              out_dtype=self.out_dtype)
            enro_asv_emb = enro_data.astype(asv_emb.dtype)
            enro_cm_emb = jnp.zeros_like(cm_emb)
        else:
            enro_asv_emb, asv_emb, enro_cm_emb, cm_emb = split_embedding_pair(
                enro_data, test_data, asv_dim, out_dtype=self.out_dtype)
        return enro_asv_emb, asv_emb, enro_cm_emb, cm_emb

    def __call__(self, enro_data, enro_length, test_data, test_length,
                 enro_num, enro_spk):
        return self._forward_emb(enro_data, test_data)


# ----------------------------------------------------------------------------
# Demo / self-check.
# ----------------------------------------------------------------------------
if __name__ == "__main__":
    key = jax.random.PRNGKey(0)
    asv_dim, cm_dim = 256, 128            # 128-lane-aligned split
    n_enro, n_test = 16, 8                # rows: multiples of 8 (f32 sublane)
    d_full = asv_dim + cm_dim

    k1, k2, k3 = jax.random.split(key, 3)
    enro = jax.random.normal(k1, (n_enro, d_full), dtype=jnp.float32)
    test = jax.random.normal(k2, (n_test, d_full), dtype=jnp.float32)

    config = {
        'asv_config': {'emb_dim': asv_dim},
        'cm_config': {'emb_dim': cm_dim},
        'update': False,
        'frontend_use_embedding_input': True,
    }
    frontend = FrontEnd(config)

    # 1) Normal path: fused single pallas_call over both matrices.
    enro_asv, asv, enro_cm, cm = jax.block_until_ready(
        frontend(enro, None, test, None, None, None))
    np.testing.assert_allclose(np.asarray(asv), np.asarray(test[:, :asv_dim]))
    np.testing.assert_allclose(np.asarray(cm), np.asarray(test[:, asv_dim:]))
    np.testing.assert_allclose(np.asarray(enro_asv),
                               np.asarray(enro[:, :asv_dim]))
    np.testing.assert_allclose(np.asarray(enro_cm),
                               np.asarray(enro[:, asv_dim:]))
    assert asv.dtype == test.dtype and enro_asv.dtype == enro.dtype

    # 2) Special case: enrolment data has only ASV columns -> enro_cm is zeros
    #    shaped like the test CM embedding (matches torch.zeros_like(cm_emb)).
    enro_only_asv = enro[:, :asv_dim]
    o2 = jax.block_until_ready(
        frontend(enro_only_asv, None, test, None, None, None))
    assert o2[0].shape == (n_enro, asv_dim)
    assert o2[2].shape == (n_test, cm_dim)
    assert float(jnp.abs(o2[2]).max()) == 0.0

    # 3) Tiled multi-step path (forced small VMEM budget -> >=2 grid steps,
    #    ragged edge block): exercises the large-N code path.
    n_big = 44
    big = jax.random.normal(k3, (n_big, d_full), dtype=jnp.float32)
    b_asv, b_cm = jax.block_until_ready(
        split_embedding(big, asv_dim, vmem_budget_bytes=64 * 1024))
    np.testing.assert_allclose(np.asarray(b_asv), np.asarray(big[:, :asv_dim]))
    np.testing.assert_allclose(np.asarray(b_cm), np.asarray(big[:, asv_dim:]))

    print("KERNEL_OK")
</pallas_src>

<mosaic_0001>
module attributes {stable_mosaic.version = 11 : i64} {
  func.func @_fused_split_kernel(%arg0: i32, %arg1: memref<16x384xf32, #tpu.memory_space<vmem>>, %arg2: memref<8x384xf32, #tpu.memory_space<vmem>>, %arg3: memref<16x256xf32, #tpu.memory_space<vmem>>, %arg4: memref<16x128xf32, #tpu.memory_space<vmem>>, %arg5: memref<8x256xf32, #tpu.memory_space<vmem>>, %arg6: memref<8x128xf32, #tpu.memory_space<vmem>>) attributes {dimension_semantics = [#tpu.dimension_semantics<arbitrary>], iteration_bounds = array<i64: 1>, scalar_prefetch = 0 : i64, scratch_operands = 0 : i64, tpu.core_type = #tpu.core_type<tc>, window_params = [{pipeline_mode = #tpu.pipeline_mode<synchronous>, transform_indices = @transform_0, window_bounds = array<i64: 16, 384>}, {pipeline_mode = #tpu.pipeline_mode<synchronous>, transform_indices = @transform_1, window_bounds = array<i64: 8, 384>}, {pipeline_mode = #tpu.pipeline_mode<synchronous>, transform_indices = @transform_2, window_bounds = array<i64: 16, 256>}, {pipeline_mode = #tpu.pipeline_mode<synchronous>, transform_indices = @transform_3, window_bounds = array<i64: 16, 128>}, {pipeline_mode = #tpu.pipeline_mode<synchronous>, transform_indices = @transform_4, window_bounds = array<i64: 8, 256>}, {pipeline_mode = #tpu.pipeline_mode<synchronous>, transform_indices = @transform_5, window_bounds = array<i64: 8, 128>}]} {
    %c0 = arith.constant 0 : index
    %c0_0 = arith.constant 0 : index
    %0 = vector.load %arg1[%c0, %c0_0] : memref<16x384xf32, #tpu.memory_space<vmem>>, vector<16x256xf32>
    %c0_1 = arith.constant 0 : index
    %c0_2 = arith.constant 0 : index
    %1 = vector.load %arg3[%c0_1, %c0_2] : memref<16x256xf32, #tpu.memory_space<vmem>>, vector<16x256xf32>
    tpu.vector_store %arg3[%c0_1, %c0_2], %0 {strides = array<i32>} : memref<16x256xf32, #tpu.memory_space<vmem>>, vector<16x256xf32>,
    %c0_3 = arith.constant 0 : index
    %c256 = arith.constant 256 : index
    %2 = vector.load %arg1[%c0_3, %c256] : memref<16x384xf32, #tpu.memory_space<vmem>>, vector<16x128xf32>
    %c0_4 = arith.constant 0 : index
    %c0_5 = arith.constant 0 : index
    %3 = vector.load %arg4[%c0_4, %c0_5] : memref<16x128xf32, #tpu.memory_space<vmem>>, vector<16x128xf32>
    tpu.vector_store %arg4[%c0_4, %c0_5], %2 {strides = array<i32>} : memref<16x128xf32, #tpu.memory_space<vmem>>, vector<16x128xf32>,
    %c0_6 = arith.constant 0 : index
    %c0_7 = arith.constant 0 : index
    %4 = vector.load %arg2[%c0_6, %c0_7] : memref<8x384xf32, #tpu.memory_space<vmem>>, vector<8x256xf32>
    %c0_8 = arith.constant 0 : index
    %c0_9 = arith.constant 0 : index
    %5 = vector.load %arg5[%c0_8, %c0_9] : memref<8x256xf32, #tpu.memory_space<vmem>>, vector<8x256xf32>
    tpu.vector_store %arg5[%c0_8, %c0_9], %4 {strides = array<i32>} : memref<8x256xf32, #tpu.memory_space<vmem>>, vector<8x256xf32>,
    %c0_10 = arith.constant 0 : index
    %c256_11 = arith.constant 256 : index
    %6 = vector.load %arg2[%c0_10, %c256_11] : memref<8x384xf32, #tpu.memory_space<vmem>>, vector<8x128xf32>
    %c0_12 = arith.constant 0 : index
    %c0_13 = arith.constant 0 : index
    %7 = vector.load %arg6[%c0_12, %c0_13] : memref<8x128xf32, #tpu.memory_space<vmem>>, vector<8x128xf32>
    tpu.vector_store %arg6[%c0_12, %c0_13], %6 {strides = array<i32>} : memref<8x128xf32, #tpu.memory_space<vmem>>, vector<8x128xf32>,
    return
  }
  func.func @transform_0(%arg0: i32) -> (i32, i32) {
    %c0_i32 = arith.constant 0 : i32
    %c0_i32_0 = arith.constant 0 : i32
    %c0_i32_1 = arith.constant 0 : i32
    return %c0_i32, %c0_i32_0 : i32, i32
  }
  func.func @transform_1(%arg0: i32) -> (i32, i32) {
    %c0_i32 = arith.constant 0 : i32
    %c0_i32_0 = arith.constant 0 : i32
    %c0_i32_1 = arith.constant 0 : i32
    return %c0_i32, %c0_i32_0 : i32, i32
  }
  func.func @transform_2(%arg0: i32) -> (i32, i32) {
    %c0_i32 = arith.constant 0 : i32
    %c0_i32_0 = arith.constant 0 : i32
    %c0_i32_1 = arith.constant 0 : i32
    return %c0_i32, %c0_i32_0 : i32, i32
  }
  func.func @transform_3(%arg0: i32) -> (i32, i32) {
    %c0_i32 = arith.constant 0 : i32
    %c0_i32_0 = arith.constant 0 : i32
    %c0_i32_1 = arith.constant 0 : i32
    return %c0_i32, %c0_i32_0 : i32, i32
  }
  func.func @transform_4(%arg0: i32) -> (i32, i32) {
    %c0_i32 = arith.constant 0 : i32
    %c0_i32_0 = arith.constant 0 : i32
    %c0_i32_1 = arith.constant 0 : i32
    return %c0_i32, %c0_i32_0 : i32, i32
  }
  func.func @transform_5(%arg0: i32) -> (i32, i32) {
    %c0_i32 = arith.constant 0 : i32
    %c0_i32_0 = arith.constant 0 : i32
    %c0_i32_1 = arith.constant 0 : i32
    return %c0_i32, %c0_i32_0 : i32, i32
  }
}

</mosaic_0001>

<llo_original>
// kernel: tpu_custom_call.1
$region0: #{tpu_custom_call.1}
  #allocation0 [shape = 'u32[]', space=smem, size = 0x4, offset = 0x4, fixed_abs, tag = 'smem constant byte address 0x4 - core index']
  #allocation1 [shape = 'u32[144,128]{1,0:T(1,128)}', space=vmem, size = 0x12000, scoped, tag = 'internal scratch']
  %s0 = inlined_call_operand.hbm [shape: f32[16,384], index: 0, kind: input, shape index: {}]
  %s1 = inlined_call_operand.hbm [shape: f32[8,384], index: 1, kind: input, shape index: {}]
  %s2 = inlined_call_operand.hbm [shape: f32[16,256], index: 2, kind: output, shape index: {0}]
  %s3 = inlined_call_operand.hbm [shape: f32[16,128], index: 3, kind: output, shape index: {1}]
  %s4 = inlined_call_operand.hbm [shape: f32[8,256], index: 4, kind: output, shape index: {2}]
  %s5 = inlined_call_operand.hbm [shape: f32[8,128], index: 5, kind: output, shape index: {3}]
  %6 = xla_tuple %s2, %s3, %s4, %s5
  %s7 = sld [smem:[#allocation0]]
  $region50: #{tpu_custom_call.1} parent=0
    _
  %s9 = ssub.s32 1, %s7
  %s10 = scalar_select 0, %s9, %s7
  $region1: #{tpu_custom_call.1} parent=0
    #allocation2 [shape = 'u8[24576]{0}', space=vmem, size = 0x6000, scoped, tag = 'input window, operand 0, single buffered']
    #allocation3 [shape = 's32[1]{0}', space=sflag, size = 0x4, scoped, tag = 'scoped memory for tpu_custom_call.1']
    #allocation4 [shape = 's32[1]{0}', space=sflag, size = 0x4, scoped, tag = 'scoped memory for tpu_custom_call.1']
    #allocation5 [shape = 'u8[12288]{0}', space=vmem, size = 0x3000, scoped, tag = 'input window, operand 1, single buffered']
    #allocation6 [shape = 's32[1]{0}', space=sflag, size = 0x4, scoped, tag = 'scoped memory for tpu_custom_call.1']
    #allocation7 [shape = 'u8[16384]{0}', space=vmem, size = 0x4000, scoped, tag = 'output window, operand 0, single buffered']
    #allocation8 [shape = 'u8[8192]{0}', space=vmem, size = 0x2000, scoped, tag = 'output window, operand 1, single buffered']
    #allocation9 [shape = 's32[1]{0}', space=sflag, size = 0x4, scoped, tag = 'scoped memory for tpu_custom_call.1']
    #allocation10 [shape = 'u8[8192]{0}', space=vmem, size = 0x2000, scoped, tag = 'output window, operand 2, single buffered']
    #allocation11 [shape = 'u8[4096]{0}', space=vmem, size = 0x1000, scoped, tag = 'output window, operand 3, single buffered']
    #allocation12 [shape = 's32[1]{0}', space=sflag, size = 0x4, scoped, tag = 'scoped memory for tpu_custom_call.1']
    %11 = vsyncpa [#allocation3], 0
    %12 = vsyncpa [#allocation6], 0
    %13 = vsyncpa [#allocation4], 0
    %14 = vsyncpa [#allocation9], 0
    %15 = vsyncpa [#allocation12], 0
    // Predicated region
    $region2: #{tpu_custom_call.1} parent=1 // pred_check
      _
    $region3: #{tpu_custom_call.1} parent=1 // pred_check_branch
      %17 = sbr.rel (0) target = $region5
    $region4: #{tpu_custom_call.1} parent=1 // pred_region
      %s19 = ssub.s32 768, 768
      %20 = vsyncadd [#allocation3], %s19
      %s21 = sshll.u32 [#allocation2], 4
      %s22 = int_to_ptr.vmem [resolvable:$true] %s21
      %27 = dma.hbm_to_vmem [thread:$0]  %s0, 768, %s22, [#allocation3], 384, 384, 24
    $region5: #{tpu_custom_call.1} parent=1 // pred_fallthru
      _
    // Predicated region
    $region6: #{tpu_custom_call.1} parent=1 // pred_check
      _
    $region7: #{tpu_custom_call.1} parent=1 // pred_check_branch
      %29 = sbr.rel (0) target = $region9
    $region8: #{tpu_custom_call.1} parent=1 // pred_region
      %s31 = ssub.s32 384, 384
      %32 = vsyncadd [#allocation6], %s31
      %s34 = sshll.u32 [#allocation5], 4
      %s35 = int_to_ptr.vmem [resolvable:$true] %s34
      %37 = dma.hbm_to_vmem [thread:$0]  %s1, 384, %s35, [#allocation6]
    $region9: #{tpu_custom_call.1} parent=1 // pred_fallthru
      _
    // Predicated region
    $region10: #{tpu_custom_call.1} parent=1 // pred_check
      _
    $region11: #{tpu_custom_call.1} parent=1 // pred_check_branch
      %39 = sbr.rel (0) target = $region13
    $region12: #{tpu_custom_call.1} parent=1 // pred_region
      %40 = dma.done [#allocation3], 768
    $region13: #{tpu_custom_call.1} parent=1 // pred_fallthru
      _
    // Predicated region
    $region14: #{tpu_custom_call.1} parent=1 // pred_check
      _
    $region15: #{tpu_custom_call.1} parent=1 // pred_check_branch
      %42 = sbr.rel (0) target = $region17
    $region16: #{tpu_custom_call.1} parent=1 // pred_region
      %43 = dma.done [#allocation6], 384
    $region17: #{tpu_custom_call.1} parent=1 // pred_fallthru
      _
    %v44 = vld [vmem:[#allocation2] sm:$0xff]
    %v45 = vld [vmem:[#allocation2 + $0x8] sm:$0xff]
    %v46 = vld [vmem:[#allocation2 + $0x18] sm:$0xff]
    %v47 = vld [vmem:[#allocation2 + $0x20] sm:$0xff]
    %48 = vst [vmem:[#allocation7] sm:$0xff] %v44
    %49 = vst [vmem:[#allocation7 + $0x8] sm:$0xff] %v45
    %50 = vst [vmem:[#allocation7 + $0x10] sm:$0xff] %v46
    %51 = vst [vmem:[#allocation7 + $0x18] sm:$0xff] %v47
    %v52 = vld [vmem:[#allocation2 + $0x10] sm:$0xff]
    %v53 = vld [vmem:[#allocation2 + $0x28] sm:$0xff]
    %54 = vst [vmem:[#allocation8] sm:$0xff] %v52
    %55 = vst [vmem:[#allocation8 + $0x8] sm:$0xff] %v53
    %v56 = vld [vmem:[#allocation5] sm:$0xff]
    %v57 = vld [vmem:[#allocation5 + $0x8] sm:$0xff]
    %58 = vst [vmem:[#allocation10] sm:$0xff] %v56
    %59 = vst [vmem:[#allocation10 + $0x8] sm:$0xff] %v57
    %v60 = vld [vmem:[#allocation5 + $0x10] sm:$0xff]
    %61 = vst [vmem:[#allocation11] sm:$0xff] %v60
    // Predicated region
    $region18: #{tpu_custom_call.1} parent=1 // pred_check
      _
    $region19: #{tpu_custom_call.1} parent=1 // pred_check_branch
      %63 = sbr.rel (0) target = $region21
    $region20: #{tpu_custom_call.1} parent=1 // pred_region
      %s65 = ssub.s32 512, 512
      %66 = vsyncadd [#allocation4], %s65
      %s67 = sshll.u32 [#allocation7], 4
      %s68 = int_to_ptr.vmem [resolvable:$true] %s67
      %73 = dma.vmem_to_hbm [thread:$0]  %s68, 512, %s2, [#allocation4], 256, 256, 16
    $region21: #{tpu_custom_call.1} parent=1 // pred_fallthru
      _
    // Predicated region
    $region22: #{tpu_custom_call.1} parent=1 // pred_check
      _
    $region23: #{tpu_custom_call.1} parent=1 // pred_check_branch
      %75 = sbr.rel (0) target = $region25
    $region24: #{tpu_custom_call.1} parent=1 // pred_region
      %s77 = ssub.s32 256, 256
      %78 = vsyncadd [#allocation9], %s77
      %s79 = sshll.u32 [#allocation8], 4
      %s80 = int_to_ptr.vmem [resolvable:$true] %s79
      %85 = dma.vmem_to_hbm [thread:$0]  %s80, 256, %s3, [#allocation9], 128, 128, 8
    $region25: #{tpu_custom_call.1} parent=1 // pred_fallthru
      _
    // Predicated region
    $region26: #{tpu_custom_call.1} parent=1 // pred_check
      _
    $region27: #{tpu_custom_call.1} parent=1 // pred_check_branch
      %87 = sbr.rel (0) target = $region29
    $region28: #{tpu_custom_call.1} parent=1 // pred_region
      %s89 = ssub.s32 256, 256
      %90 = vsyncadd [#allocation9], %s89
      %s92 = sshll.u32 [#allocation10], 4
      %s93 = int_to_ptr.vmem [resolvable:$true] %s92
      %95 = dma.vmem_to_hbm [thread:$0]  %s93, 256, %s4, [#allocation9]
    $region29: #{tpu_custom_call.1} parent=1 // pred_fallthru
      _
    // Predicated region
    $region30: #{tpu_custom_call.1} parent=1 // pred_check
      _
    $region31: #{tpu_custom_call.1} parent=1 // pred_check_branch
      %97 = sbr.rel (0) target = $region33
    $region32: #{tpu_custom_call.1} parent=1 // pred_region
      %s99 = ssub.s32 128, 128
      %100 = vsyncadd [#allocation12], %s99
      %s102 = sshll.u32 [#allocation11], 4
      %s103 = int_to_ptr.vmem [resolvable:$true] %s102
      %105 = dma.vmem_to_hbm [thread:$0]  %s103, 128, %s5, [#allocation12]
    $region33: #{tpu_custom_call.1} parent=1 // pred_fallthru
      _
    // Predicated region
    $region34: #{tpu_custom_call.1} parent=1 // pred_check
      _
    $region35: #{tpu_custom_call.1} parent=1 // pred_check_branch
      %107 = sbr.rel (0) target = $region37
    $region36: #{tpu_custom_call.1} parent=1 // pred_region
      %108 = dma.done [#allocation4], 512
    $region37: #{tpu_custom_call.1} parent=1 // pred_fallthru
      _
    // Predicated region
    $region38: #{tpu_custom_call.1} parent=1 // pred_check
      _
    $region39: #{tpu_custom_call.1} parent=1 // pred_check_branch
      %110 = sbr.rel (0) target = $region41
    $region40: #{tpu_custom_call.1} parent=1 // pred_region
      %111 = dma.done [#allocation9], 256
    $region41: #{tpu_custom_call.1} parent=1 // pred_fallthru
      _
    // Predicated region
    $region42: #{tpu_custom_call.1} parent=1 // pred_check
      _
    $region43: #{tpu_custom_call.1} parent=1 // pred_check_branch
      %113 = sbr.rel (0) target = $region45
    $region44: #{tpu_custom_call.1} parent=1 // pred_region
      %114 = dma.done [#allocation9], 256
    $region45: #{tpu_custom_call.1} parent=1 // pred_fallthru
      _
    // Predicated region
    $region46: #{tpu_custom_call.1} parent=1 // pred_check
      _
    $region47: #{tpu_custom_call.1} parent=1 // pred_check_branch
      %116 = sbr.rel (0) target = $region49
    $region48: #{tpu_custom_call.1} parent=1 // pred_region
      %117 = dma.done [#allocation12], 128
    $region49: #{tpu_custom_call.1} parent=1 // pred_fallthru
      _
    %118 = vsyncpa [#allocation3], 1
    %119 = vsyncpa [#allocation6], 1
    %120 = vsyncpa [#allocation4], 1
    %121 = vsyncpa [#allocation9], 1
    %122 = vsyncpa [#allocation12], 1

</llo_original>
